<compile_context>
chip_gen: v6e
topology: v6e:2x2x1
jax: 0.10.0
libtpu: 0.0.40
codegen_flags: <defaults>
</compile_context>

<pallas_src>
import functools

import jax
import jax.numpy as jnp
from jax import lax
from jax.experimental import pallas as pl
from jax.experimental.pallas import tpu as pltpu

_MIB = 1024 * 1024
_SINGLE_PASS_BUDGET = 32 * _MIB          # max estimated working set for 1-pass
_VMEM_CEILING = 56 * _MIB                # leaves headroom on v7x's 64 MiB VMEM


# --------------------------------------------------------------------------
# helpers
# --------------------------------------------------------------------------
def _fold_groups(row, groups, emb):
    """row: (1, groups*emb) per-lane sums.

    Returns a (1, groups*emb) row where lane j holds the total over all groups
    for channel (j % emb), i.e. the per-channel reduction already broadcast
    back to the packed lane width.  Uses XLU lane rotations (cheap).
    """
    if groups == 1:
        return row
    total = row
    for g in range(1, groups):
        total = total + pltpu.roll(row, shift=g * emb, axis=1)
    return total


def _choose_packing(n, e):
    """Pick G so that the packed lane width G*e is a dense multiple of 128."""
    if e >= 128:
        return 1
    for target in (512, 256, 128):
        if target % e == 0 and n % (target // e) == 0:
            return target // e
    return 1


def _choose_lane_tile(lane_width):
    """Largest lane tile (multiple of 128 unless full-width) dividing L."""
    if lane_width % 128 != 0 or lane_width <= 1024:
        return lane_width
    for cand in (1024, 768, 512, 384, 256, 128):
        if lane_width % cand == 0:
            return cand
    return lane_width  # unreachable (lane_width % 128 == 0)


# --------------------------------------------------------------------------
# kernels
# --------------------------------------------------------------------------
def _dice_single_kernel(x_ref, alpha_ref, gamma_ref, beta_ref, o_ref,
                        *, eps, n_total, groups, emb):
    """All rows sharing the BN statistics are resident: one fused pass."""
    x = x_ref[...].astype(jnp.float32)                       # (rows, lanes)
    s = _fold_groups(jnp.sum(x, axis=0, keepdims=True), groups, emb)
    q = _fold_groups(jnp.sum(x * x, axis=0, keepdims=True), groups, emb)
    inv_n = 1.0 / float(n_total)
    mean = s * inv_n
    var = jnp.maximum(q * inv_n - mean * mean, 0.0)          # guard cancellation
    inv_std = lax.rsqrt(var + eps)
    scale = gamma_ref[...].astype(jnp.float32) * inv_std     # (1, lanes)
    bias = beta_ref[...].astype(jnp.float32) - mean * scale
    alpha = alpha_ref[...].astype(jnp.float32)
    p = jax.nn.sigmoid(x * scale + bias)
    o_ref[...] = (x * (alpha + p * (1.0 - alpha))).astype(o_ref.dtype)


def _dice_stats_kernel(x_ref, gamma_ref, beta_ref, scale_ref, bias_ref,
                       s_acc, q_acc, *, eps, n_total, groups, emb,
                       n_rows, tile_rows):
    """Streaming pass 1: accumulate per-lane sum / sumsq over N tiles,
    finalize per-channel scale/bias on the last tile."""
    k = pl.program_id(1)

    @pl.when(k == 0)
    def _init():
        s_acc[...] = jnp.zeros_like(s_acc)
        q_acc[...] = jnp.zeros_like(q_acc)

    x = x_ref[...].astype(jnp.float32)                       # (tile_rows, te)
    if n_rows % tile_rows != 0:                              # ragged-N tail
        row = lax.broadcasted_iota(jnp.int32, x.shape, 0) + k * tile_rows
        x = jnp.where(row < n_rows, x, 0.0)
    s_acc[...] = s_acc[...] + jnp.sum(x, axis=0, keepdims=True)
    q_acc[...] = q_acc[...] + jnp.sum(x * x, axis=0, keepdims=True)

    @pl.when(k == pl.num_programs(1) - 1)
    def _finalize():
        s = _fold_groups(s_acc[...], groups, emb)
        q = _fold_groups(q_acc[...], groups, emb)
        inv_n = 1.0 / float(n_total)
        mean = s * inv_n
        var = jnp.maximum(q * inv_n - mean * mean, 0.0)
        inv_std = lax.rsqrt(var + eps)
        scale = gamma_ref[...].astype(jnp.float32) * inv_std
        scale_ref[...] = scale
        bias_ref[...] = beta_ref[...].astype(jnp.float32) - mean * scale


def _dice_apply_kernel(x_ref, scale_ref, bias_ref, alpha_ref, o_ref):
    """Streaming pass 2: fully parallel normalize + sigmoid + dice mix."""
    x = x_ref[...].astype(jnp.float32)
    p = jax.nn.sigmoid(x * scale_ref[...] + bias_ref[...])
    alpha = alpha_ref[...].astype(jnp.float32)
    o_ref[...] = (x * (alpha + p * (1.0 - alpha))).astype(o_ref.dtype)


# --------------------------------------------------------------------------
# wrappers
# --------------------------------------------------------------------------
def _dice_single_pass(xw, alpha, gamma, beta, eps, *, n_total, groups, emb, te):
    n2, lane = xw.shape
    ne = lane // te
    itemsize = xw.dtype.itemsize
    bufs = 1 if ne == 1 else 2
    need = n2 * te * (2 * bufs * itemsize + 20)
    vmem_limit = int(min(max(2 * need, 32 * _MIB), _VMEM_CEILING))
    cost = pl.CostEstimate(flops=10 * n2 * lane, transcendentals=n2 * lane,
                           bytes_accessed=2 * n2 * lane * itemsize)
    kernel = functools.partial(_dice_single_kernel, eps=eps, n_total=n_total,
                               groups=groups, emb=emb)
    out_shape = jax.ShapeDtypeStruct((n2, lane), xw.dtype)

    if ne == 1:
        # Single grid step: skip BlockSpec tiling entirely so nothing is
        # double-buffered (whole arrays live once in VMEM).
        return pl.pallas_call(
            kernel,
            out_shape=out_shape,
            compiler_params=pltpu.CompilerParams(vmem_limit_bytes=vmem_limit),
            cost_estimate=cost,
        )(xw, alpha, gamma, beta)

    return pl.pallas_call(
        kernel,
        out_shape=out_shape,
        grid=(ne,),
        in_specs=[
            pl.BlockSpec((n2, te), lambda j: (0, j)),
            pl.BlockSpec((1, te), lambda j: (0, j)),
            pl.BlockSpec((1, te), lambda j: (0, j)),
            pl.BlockSpec((1, te), lambda j: (0, j)),
        ],
        out_specs=pl.BlockSpec((n2, te), lambda j: (0, j)),
        compiler_params=pltpu.CompilerParams(
            dimension_semantics=("parallel",), vmem_limit_bytes=vmem_limit),
        cost_estimate=cost,
    )(xw, alpha, gamma, beta)


def _dice_two_pass(xw, alpha, gamma, beta, eps, *, n_total, groups, emb, te):
    n2, lane = xw.shape
    ne = lane // te
    itemsize = xw.dtype.itemsize

    # Rows per tile: multiple of 8, ~<= 4 MiB of f32 working data per block.
    tn_cap = max(8, ((4 * _MIB) // (te * 4)) // 8 * 8)
    tn = min(1024, tn_cap, max(8, ((n2 + 7) // 8) * 8))
    nk = pl.cdiv(n2, tn)
    vmem_limit = int(min(max(8 * tn * te * 4 + 4 * _MIB, 32 * _MIB),
                         _VMEM_CEILING))

    # Pass 1: per-channel scale/bias.
    # TODO(synk): the stats pass only has `ne` parallel grid steps; splitting
    # the N reduction across v7x's two TensorCores would need an extra
    # partial-sum combine step (HBM-bound anyway, so left out).
    stats_kernel = functools.partial(
        _dice_stats_kernel, eps=eps, n_total=n_total, groups=groups, emb=emb,
        n_rows=n2, tile_rows=tn)
    scale, bias = pl.pallas_call(
        stats_kernel,
        out_shape=(jax.ShapeDtypeStruct((1, lane), jnp.float32),
                   jax.ShapeDtypeStruct((1, lane), jnp.float32)),
        grid=(ne, nk),
        in_specs=[
            pl.BlockSpec((tn, te), lambda j, k: (k, j)),
            pl.BlockSpec((1, te), lambda j, k: (0, j)),
            pl.BlockSpec((1, te), lambda j, k: (0, j)),
        ],
        out_specs=(pl.BlockSpec((1, te), lambda j, k: (0, j)),
                   pl.BlockSpec((1, te), lambda j, k: (0, j))),
        scratch_shapes=[pltpu.VMEM((1, te), jnp.float32),
                        pltpu.VMEM((1, te), jnp.float32)],
        compiler_params=pltpu.CompilerParams(
            dimension_semantics=("parallel", "arbitrary"),
            vmem_limit_bytes=vmem_limit),
        cost_estimate=pl.CostEstimate(flops=4 * n2 * lane, transcendentals=lane,
                                      bytes_accessed=n2 * lane * itemsize),
    )(xw, gamma, beta)

    # Pass 2: elementwise normalize + sigmoid + dice, fully parallel grid.
    return pl.pallas_call(
        _dice_apply_kernel,
        out_shape=jax.ShapeDtypeStruct((n2, lane), xw.dtype),
        grid=(ne, nk),
        in_specs=[
            pl.BlockSpec((tn, te), lambda j, k: (k, j)),
            pl.BlockSpec((1, te), lambda j, k: (0, j)),
            pl.BlockSpec((1, te), lambda j, k: (0, j)),
            pl.BlockSpec((1, te), lambda j, k: (0, j)),
        ],
        out_specs=pl.BlockSpec((tn, te), lambda j, k: (k, j)),
        compiler_params=pltpu.CompilerParams(
            dimension_semantics=("parallel", "parallel"),
            vmem_limit_bytes=vmem_limit),
        cost_estimate=pl.CostEstimate(flops=8 * n2 * lane,
                                      transcendentals=n2 * lane,
                                      bytes_accessed=2 * n2 * lane * itemsize),
    )(xw, scale, bias, alpha)


def _dice_2d(x2d, alpha, gamma, beta, eps):
    """x2d: [N, E] -> [N, E]; BN stats per E column over all N rows."""
    n, e = x2d.shape

    # Lane packing for small E so the lane dim is a dense multiple of 128.
    groups = _choose_packing(n, e)
    lane = groups * e
    n2 = n // groups
    if groups > 1:
        xw = x2d.reshape(n2, lane)            # lane j <-> channel (j % e)
        alpha = jnp.tile(alpha, (1, groups))
        gamma = jnp.tile(gamma, (1, groups))
        beta = jnp.tile(beta, (1, groups))
    else:
        xw = x2d

    te = lane if groups > 1 else _choose_lane_tile(lane)
    ne = lane // te
    bufs = 1 if ne == 1 else 2
    need = n2 * te * (2 * bufs * xw.dtype.itemsize + 20)

    if need <= _SINGLE_PASS_BUDGET:
        out = _dice_single_pass(xw, alpha, gamma, beta, eps,
                                n_total=n, groups=groups, emb=e, te=te)
    else:
        out = _dice_two_pass(xw, alpha, gamma, beta, eps,
                             n_total=n, groups=groups, emb=e, te=te)

    if groups > 1:
        out = out.reshape(n, e)
    return out


class DicePallas:
    """Pallas port of the torch Dice module (forward only, training-mode BN)."""

    def __init__(self, emb_size, dim=2, epsilon=1e-8, dtype=jnp.float32):
        assert dim == 2 or dim == 3
        self.dim = dim
        self.eps = float(epsilon)
        # Deterministic init matching the torch defaults: bn.weight=1,
        # bn.bias=0, alpha=0.  (alpha is (E,) for dim=2 and (E,1) for dim=3 in
        # torch; both broadcast per embedding channel, so a (1,E) row works.)
        self.gamma = jnp.ones((1, emb_size), dtype)
        self.beta = jnp.zeros((1, emb_size), dtype)
        self.alpha = jnp.zeros((1, emb_size), dtype)
        # TODO(synk): BatchNorm1d running_mean/running_var buffer updates (a
        # training-time side effect) are not reproduced; only the forward
        # output, which uses batch statistics, is.

    def __call__(self, x):
        assert x.ndim == self.dim
        if self.dim == 2:
            return _dice_2d(x, self.alpha, self.gamma, self.beta, self.eps)
        # dim == 3: torch transpose(1,2) -> BN1d -> transpose back collapses
        # to a flat [B*F, E] view with E as the lane (channel) dim.
        b, f, e = x.shape
        y = _dice_2d(x.reshape(b * f, e), self.alpha, self.gamma,
                     self.beta, self.eps)
        return y.reshape(b, f, e)


# --------------------------------------------------------------------------
# pure-JAX reference + tests
# --------------------------------------------------------------------------
def _dice_reference(x, alpha, gamma, beta, eps):
    shape = x.shape
    x2 = x.reshape(-1, shape[-1])
    mean = jnp.mean(x2, axis=0, keepdims=True)
    var = jnp.mean((x2 - mean) ** 2, axis=0, keepdims=True)
    x_hat = (x2 - mean) / jnp.sqrt(var + eps) * gamma + beta
    p = jax.nn.sigmoid(x_hat)
    out = alpha * (1.0 - p) * x2 + p * x2
    return out.reshape(shape)


if __name__ == "__main__":
    key = jax.random.PRNGKey(0)
    k1, k2, k3, k4 = jax.random.split(key, 4)
    emb = 32

    # A) dim == 2, tiny -> single-pass, lane-packed (E=32 < 128).
    dice2 = DicePallas(emb, dim=2)
    dice2.alpha = jnp.full((1, emb), 0.25, jnp.float32)
    xa = jax.random.normal(k1, (8, emb), jnp.float32)
    ya = jax.block_until_ready(dice2(xa))
    ra = _dice_reference(xa, dice2.alpha, dice2.gamma, dice2.beta, dice2.eps)
    assert ya.shape == xa.shape and ya.dtype == xa.dtype
    assert jnp.allclose(ya, ra, atol=1e-5, rtol=1e-5)

    # B) dim == 3, tiny -> single-pass, lane-packed.
    dice3 = DicePallas(emb, dim=3)
    dice3.alpha = jnp.linspace(-0.5, 0.5, emb, dtype=jnp.float32)[None, :]
    xb = jax.random.normal(k2, (2, 8, emb), jnp.float32)
    yb = jax.block_until_ready(dice3(xb))
    rb = _dice_reference(xb, dice3.alpha, dice3.gamma, dice3.beta, dice3.eps)
    assert yb.shape == xb.shape and yb.dtype == xb.dtype
    assert jnp.allclose(yb, rb, atol=1e-5, rtol=1e-5)

    # C) dim == 2, larger batch with E >= 128 -> streaming two-pass path.
    dice_c = DicePallas(256, dim=2)
    dice_c.alpha = jnp.linspace(-1.0, 1.0, 256, dtype=jnp.float32)[None, :]
    xc = jax.random.normal(k3, (8192, 256), jnp.float32)
    yc = jax.block_until_ready(dice_c(xc))
    rc = _dice_reference(xc, dice_c.alpha, dice_c.gamma, dice_c.beta, dice_c.eps)
    assert jnp.allclose(yc, rc, atol=1e-3, rtol=1e-3)

    # D) dim == 2, big batch with small E -> two-pass + lane packing.
    dice_d = DicePallas(emb, dim=2)
    dice_d.alpha = jnp.full((1, emb), -0.1, jnp.float32)
    xd = jax.random.normal(k4, (65536, emb), jnp.float32)
    yd = jax.block_until_ready(dice_d(xd))
    rd = _dice_reference(xd, dice_d.alpha, dice_d.gamma, dice_d.beta, dice_d.eps)
    assert jnp.allclose(yd, rd, atol=1e-3, rtol=1e-3)

    print("KERNEL_OK")
</pallas_src>

<mosaic_0001>
module attributes {stable_mosaic.version = 11 : i64} {
  func.func @_dice_single_kernel(%arg0: memref<1x256xf32, #tpu.memory_space<vmem>>, %arg1: memref<1x256xf32, #tpu.memory_space<vmem>>, %arg2: memref<1x256xf32, #tpu.memory_space<vmem>>, %arg3: memref<1x256xf32, #tpu.memory_space<vmem>>, %arg4: memref<1x256xf32, #tpu.memory_space<vmem>>) attributes {dimension_semantics = [], scalar_prefetch = 0 : i64, scratch_operands = 0 : i64, tpu.core_type = #tpu.core_type<tc>} {
    %c0 = arith.constant 0 : index
    %c0_0 = arith.constant 0 : index
    %0 = vector.load %arg0[%c0, %c0_0] : memref<1x256xf32, #tpu.memory_space<vmem>>, vector<1x256xf32>
    %cst = arith.constant dense<0.000000e+00> : vector<256xf32>
    %1 = vector.multi_reduction <add>, %0, %cst [0] : vector<1x256xf32> to vector<256xf32>
    %2 = vector.shape_cast %1 : vector<256xf32> to vector<1x256xf32>
    %c32_i32 = arith.constant 32 : i32
    %3 = tpu.dynamic_rotate %2 by %c32_i32 dim 1 : vector<1x256xf32>, i32 -> vector<1x256xf32>
    %4 = arith.addf %2, %3 : vector<1x256xf32>
    %c64_i32 = arith.constant 64 : i32
    %5 = tpu.dynamic_rotate %2 by %c64_i32 dim 1 : vector<1x256xf32>, i32 -> vector<1x256xf32>
    %6 = arith.addf %4, %5 : vector<1x256xf32>
    %c96_i32 = arith.constant 96 : i32
    %7 = tpu.dynamic_rotate %2 by %c96_i32 dim 1 : vector<1x256xf32>, i32 -> vector<1x256xf32>
    %8 = arith.addf %6, %7 : vector<1x256xf32>
    %c128_i32 = arith.constant 128 : i32
    %9 = tpu.dynamic_rotate %2 by %c128_i32 dim 1 : vector<1x256xf32>, i32 -> vector<1x256xf32>
    %10 = arith.addf %8, %9 : vector<1x256xf32>
    %c160_i32 = arith.constant 160 : i32
    %11 = tpu.dynamic_rotate %2 by %c160_i32 dim 1 : vector<1x256xf32>, i32 -> vector<1x256xf32>
    %12 = arith.addf %10, %11 : vector<1x256xf32>
    %c192_i32 = arith.constant 192 : i32
    %13 = tpu.dynamic_rotate %2 by %c192_i32 dim 1 : vector<1x256xf32>, i32 -> vector<1x256xf32>
    %14 = arith.addf %12, %13 : vector<1x256xf32>
    %c224_i32 = arith.constant 224 : i32
    %15 = tpu.dynamic_rotate %2 by %c224_i32 dim 1 : vector<1x256xf32>, i32 -> vector<1x256xf32>
    %16 = arith.addf %14, %15 : vector<1x256xf32>
    %17 = arith.mulf %0, %0 : vector<1x256xf32>
    %cst_1 = arith.constant dense<0.000000e+00> : vector<256xf32>
    %18 = vector.multi_reduction <add>, %17, %cst_1 [0] : vector<1x256xf32> to vector<256xf32>
    %19 = vector.shape_cast %18 : vector<256xf32> to vector<1x256xf32>
    %c32_i32_2 = arith.constant 32 : i32
    %20 = tpu.dynamic_rotate %19 by %c32_i32_2 dim 1 : vector<1x256xf32>, i32 -> vector<1x256xf32>
    %21 = arith.addf %19, %20 : vector<1x256xf32>
    %c64_i32_3 = arith.constant 64 : i32
    %22 = tpu.dynamic_rotate %19 by %c64_i32_3 dim 1 : vector<1x256xf32>, i32 -> vector<1x256xf32>
    %23 = arith.addf %21, %22 : vector<1x256xf32>
    %c96_i32_4 = arith.constant 96 : i32
    %24 = tpu.dynamic_rotate %19 by %c96_i32_4 dim 1 : vector<1x256xf32>, i32 -> vector<1x256xf32>
    %25 = arith.addf %23, %24 : vector<1x256xf32>
    %c128_i32_5 = arith.constant 128 : i32
    %26 = tpu.dynamic_rotate %19 by %c128_i32_5 dim 1 : vector<1x256xf32>, i32 -> vector<1x256xf32>
    %27 = arith.addf %25, %26 : vector<1x256xf32>
    %c160_i32_6 = arith.constant 160 : i32
    %28 = tpu.dynamic_rotate %19 by %c160_i32_6 dim 1 : vector<1x256xf32>, i32 -> vector<1x256xf32>
    %29 = arith.addf %27, %28 : vector<1x256xf32>
    %c192_i32_7 = arith.constant 192 : i32
    %30 = tpu.dynamic_rotate %19 by %c192_i32_7 dim 1 : vector<1x256xf32>, i32 -> vector<1x256xf32>
    %31 = arith.addf %29, %30 : vector<1x256xf32>
    %c224_i32_8 = arith.constant 224 : i32
    %32 = tpu.dynamic_rotate %19 by %c224_i32_8 dim 1 : vector<1x256xf32>, i32 -> vector<1x256xf32>
    %33 = arith.addf %31, %32 : vector<1x256xf32>
    %cst_9 = arith.constant 1.250000e-01 : f32
    %34 = vector.broadcast %cst_9 : f32 to vector<1x256xf32>
    %35 = arith.mulf %16, %34 : vector<1x256xf32>
    %cst_10 = arith.constant 1.250000e-01 : f32
    %36 = vector.broadcast %cst_10 : f32 to vector<1x256xf32>
    %37 = arith.mulf %33, %36 : vector<1x256xf32>
    %38 = arith.mulf %35, %35 : vector<1x256xf32>
    %39 = arith.subf %37, %38 : vector<1x256xf32>
    %cst_11 = arith.constant 0.000000e+00 : f32
    %40 = vector.broadcast %cst_11 : f32 to vector<1x256xf32>
    %41 = arith.maximumf %39, %40 : vector<1x256xf32>
    %cst_12 = arith.constant 9.99999993E-9 : f32
    %42 = vector.broadcast %cst_12 : f32 to vector<1x256xf32>
    %43 = arith.addf %41, %42 : vector<1x256xf32>
    %44 = math.rsqrt %43 : vector<1x256xf32>
    %c0_13 = arith.constant 0 : index
    %c0_14 = arith.constant 0 : index
    %45 = vector.load %arg2[%c0_13, %c0_14] : memref<1x256xf32, #tpu.memory_space<vmem>>, vector<1x256xf32>
    %46 = arith.mulf %45, %44 : vector<1x256xf32>
    %c0_15 = arith.constant 0 : index
    %c0_16 = arith.constant 0 : index
    %47 = vector.load %arg3[%c0_15, %c0_16] : memref<1x256xf32, #tpu.memory_space<vmem>>, vector<1x256xf32>
    %48 = arith.mulf %35, %46 : vector<1x256xf32>
    %49 = arith.subf %47, %48 : vector<1x256xf32>
    %c0_17 = arith.constant 0 : index
    %c0_18 = arith.constant 0 : index
    %50 = vector.load %arg1[%c0_17, %c0_18] : memref<1x256xf32, #tpu.memory_space<vmem>>, vector<1x256xf32>
    %51 = arith.mulf %0, %46 : vector<1x256xf32>
    %52 = arith.addf %51, %49 : vector<1x256xf32>
    %53 = arith.negf %52 : vector<1x256xf32>
    %54 = math.exp %53 : vector<1x256xf32>
    %cst_19 = arith.constant 1.000000e+00 : f32
    %55 = vector.broadcast %cst_19 : f32 to vector<1x256xf32>
    %56 = arith.addf %55, %54 : vector<1x256xf32>
    %57 = arith.divf %55, %56 : vector<1x256xf32>
    %cst_20 = arith.constant 1.000000e+00 : f32
    %58 = vector.broadcast %cst_20 : f32 to vector<1x256xf32>
    %59 = arith.subf %58, %50 : vector<1x256xf32>
    %60 = arith.mulf %57, %59 : vector<1x256xf32>
    %61 = arith.addf %50, %60 : vector<1x256xf32>
    %62 = arith.mulf %0, %61 : vector<1x256xf32>
    %c0_21 = arith.constant 0 : index
    %c0_22 = arith.constant 0 : index
    %63 = vector.load %arg4[%c0_21, %c0_22] : memref<1x256xf32, #tpu.memory_space<vmem>>, vector<1x256xf32>
    tpu.vector_store %arg4[%c0_21, %c0_22], %62 {strides = array<i32>} : memref<1x256xf32, #tpu.memory_space<vmem>>, vector<1x256xf32>,
    return
  }
}

</mosaic_0001>

<llo_original>
// kernel: tpu_custom_call.1
$region0: #{tpu_custom_call.1}
  #allocation0 [shape = 'u32[]', space=smem, size = 0x4, offset = 0x4, fixed_abs, tag = 'smem constant byte address 0x4 - core index']
  #allocation1 [shape = 'u32[144,128]{1,0:T(1,128)}', space=vmem, size = 0x12000, scoped, tag = 'internal scratch']
  %s0 = inlined_call_operand.hbm [shape: f32[1,256], index: 0, kind: input, shape index: {}]
  %s1 = inlined_call_operand.hbm [shape: f32[1,256], index: 1, kind: input, shape index: {}]
  %s2 = inlined_call_operand.vmem [shape: f32[1,256], index: 2, kind: input, shape index: {}]
  %s3 = inlined_call_operand.vmem [shape: f32[1,256], index: 3, kind: input, shape index: {}]
  %s4 = inlined_call_operand.hbm [shape: f32[1,256], index: 4, kind: output, shape index: {}]
  %s5 = sld [smem:[#allocation0]]
  $region34: #{tpu_custom_call.1} parent=0
    _
  %s7 = ssub.s32 1, %s5
  %s8 = scalar_select 0, %s7, %s5
  $region1: #{tpu_custom_call.1} parent=0
    #allocation2 [shape = 'u8[1024]{0}', space=vmem, size = 0x400, scoped, tag = 'input window, operand 0, single buffered']
    #allocation3 [shape = 's32[1]{0}', space=sflag, size = 0x4, scoped, tag = 'scoped memory for tpu_custom_call.1']
    #allocation4 [shape = 's32[1]{0}', space=sflag, size = 0x4, scoped, tag = 'scoped memory for tpu_custom_call.1']
    #allocation5 [shape = 'u8[1024]{0}', space=vmem, size = 0x400, scoped, tag = 'input window, operand 1, single buffered']
    #allocation6 [shape = 's32[1]{0}', space=sflag, size = 0x4, scoped, tag = 'scoped memory for tpu_custom_call.1']
    #allocation7 [shape = 'u8[1024]{0}', space=vmem, size = 0x400, scoped, tag = 'output window, operand 0, single buffered']
    %9 = vsyncpa [#allocation3], 0
    %10 = vsyncpa [#allocation6], 0
    %11 = vsyncpa [#allocation4], 0
    // Predicated region
    $region2: #{tpu_custom_call.1} parent=1 // pred_check
      _
    $region3: #{tpu_custom_call.1} parent=1 // pred_check_branch
      %13 = sbr.rel (0) target = $region5
    $region4: #{tpu_custom_call.1} parent=1 // pred_region
      %s15 = ssub.s32 32, 32
      %16 = vsyncadd [#allocation3], %s15
      %s18 = sshll.u32 [#allocation2], 4
      %s19 = int_to_ptr.vmem [resolvable:$true] %s18
      %21 = dma.hbm_to_vmem [thread:$0]  %s0, 32, %s19, [#allocation3]
    $region5: #{tpu_custom_call.1} parent=1 // pred_fallthru
      _
    // Predicated region
    $region6: #{tpu_custom_call.1} parent=1 // pred_check
      _
    $region7: #{tpu_custom_call.1} parent=1 // pred_check_branch
      %23 = sbr.rel (0) target = $region9
    $region8: #{tpu_custom_call.1} parent=1 // pred_region
      %s25 = ssub.s32 32, 32
      %26 = vsyncadd [#allocation6], %s25
      %s28 = sshll.u32 [#allocation5], 4
      %s29 = int_to_ptr.vmem [resolvable:$true] %s28
      %31 = dma.hbm_to_vmem [thread:$0]  %s1, 32, %s29, [#allocation6]
    $region9: #{tpu_custom_call.1} parent=1 // pred_fallthru
      _
    // Predicated region
    $region10: #{tpu_custom_call.1} parent=1 // pred_check
      _
    $region11: #{tpu_custom_call.1} parent=1 // pred_check_branch
      %33 = sbr.rel (0) target = $region13
    $region12: #{tpu_custom_call.1} parent=1 // pred_region
      _
    $region13: #{tpu_custom_call.1} parent=1 // pred_fallthru
      _
    // Predicated region
    $region14: #{tpu_custom_call.1} parent=1 // pred_check
      _
    $region15: #{tpu_custom_call.1} parent=1 // pred_check_branch
      %35 = sbr.rel (0) target = $region17
    $region16: #{tpu_custom_call.1} parent=1 // pred_region
      _
    $region17: #{tpu_custom_call.1} parent=1 // pred_fallthru
      _
    // Predicated region
    $region18: #{tpu_custom_call.1} parent=1 // pred_check
      _
    $region19: #{tpu_custom_call.1} parent=1 // pred_check_branch
      %37 = sbr.rel (0) target = $region21
    $region20: #{tpu_custom_call.1} parent=1 // pred_region
      %38 = dma.done [#allocation3], 32
    $region21: #{tpu_custom_call.1} parent=1 // pred_fallthru
      _
    // Predicated region
    $region22: #{tpu_custom_call.1} parent=1 // pred_check
      _
    $region23: #{tpu_custom_call.1} parent=1 // pred_check_branch
      %40 = sbr.rel (0) target = $region25
    $region24: #{tpu_custom_call.1} parent=1 // pred_region
      %41 = dma.done [#allocation6], 32
    $region25: #{tpu_custom_call.1} parent=1 // pred_fallthru
      _
    %v42 = vld [vmem:[#allocation2] sm:$0x3]
    %v43 = vadd.f32 %v42, 0.0
    %v45 = vlaneseq
    %v46 = vshrl.u32 %v45, 7
    %v47 = vsub.s32 0, %v46
    %v48 = vrot.slane %v43, %v47
    %v49 = vlaneseq
    %v50 = vshrl.u32 %v49, 7
    %v51 = vsub.s32 1, %v50
    %v52 = vrot.slane %v43, %v51
    %55 = vrot.lane.b32.xlu0 %v48, 32
    %v56 = vpop.permute.xlu0 %55
    %57 = vrot.lane.b32.xlu0 %v52, 32
    %v58 = vpop.permute.xlu0 %57
    %v59 = vlaneseq
    %v60 = vand.u32 %v59, 127
    %vm61 = vcmp.lt.s32.totalorder %v60, 32
    %v62 = vsel %vm61, %v56, %v58
    %v63 = vsel %vm61, %v58, %v56
    %v66 = vcombine.low %v63, %v62
    %v68 = vunpack.c.l.s4 1966171168
    %v69 = vunpack.c.0.s8 %v68
    %v70 = vlaneseq
    %v71 = vshrl.u32 %v70, 7
    %v72 = vsub.s32 %v69, %v71
    %v73 = vrot.slane %v66, %v72
    %v75 = vunpack.c.l.s4 1966171168
    %v76 = vunpack.c.0.s8 %v75
    %v77 = vlaneseq
    %v78 = vshrl.u32 %v77, 7
    %v79 = vsub.s32 %v76, %v78
    %v80 = vrot.slane %v73, %v79
    %v82 = vadd.f32 %v43, %v80
    %83 = vrot.lane.b32.xlu0 %v48, 64
    %v84 = vpop.permute.xlu0 %83
    %85 = vrot.lane.b32.xlu0 %v52, 64
    %v86 = vpop.permute.xlu0 %85
    %vm87 = vcmp.lt.s32.totalorder %v60, 64
    %v88 = vsel %vm87, %v84, %v86
    %v89 = vsel %vm87, %v86, %v84
    %v92 = vcombine.low %v89, %v88
    %v94 = vunpack.c.l.s4 1966171168
    %v95 = vunpack.c.0.s8 %v94
    %v96 = vlaneseq
    %v97 = vshrl.u32 %v96, 7
    %v98 = vsub.s32 %v95, %v97
    %v99 = vrot.slane %v92, %v98
    %v101 = vunpack.c.l.s4 1966171168
    %v102 = vunpack.c.0.s8 %v101
    %v103 = vlaneseq
    %v104 = vshrl.u32 %v103, 7
    %v105 = vsub.s32 %v102, %v104
    %v106 = vrot.slane %v99, %v105
    %v108 = vadd.f32 %v82, %v106
    %109 = vrot.lane.b32.xlu0 %v48, 96
    %v110 = vpop.permute.xlu0 %109
    %111 = vrot.lane.b32.xlu0 %v52, 96
    %v112 = vpop.permute.xlu0 %111
    %vm113 = vcmp.lt.s32.totalorder %v60, 96
    %v114 = vsel %vm113, %v110, %v112
    %v115 = vsel %vm113, %v112, %v110
    %v118 = vcombine.low %v115, %v114
    %v120 = vunpack.c.l.s4 1966171168
    %v121 = vunpack.c.0.s8 %v120
    %v122 = vlaneseq
    %v123 = vshrl.u32 %v122, 7
    %v124 = vsub.s32 %v121, %v123
    %v125 = vrot.slane %v118, %v124
    %v127 = vunpack.c.l.s4 1966171168
    %v128 = vunpack.c.0.s8 %v127
    %v129 = vlaneseq
    %v130 = vshrl.u32 %v129, 7
    %v131 = vsub.s32 %v128, %v130
    %v132 = vrot.slane %v125, %v131
    %v134 = vadd.f32 %v108, %v132
    %v135 = vcombine.low %v52, %v48
    %v137 = vunpack.c.l.s4 1966171168
    %v138 = vunpack.c.0.s8 %v137
    %v139 = vlaneseq
    %v140 = vshrl.u32 %v139, 7
    %v141 = vsub.s32 %v138, %v140
    %v142 = vrot.slane %v135, %v141
    %v144 = vunpack.c.l.s4 1966171168
    %v145 = vunpack.c.0.s8 %v144
    %v146 = vlaneseq
    %v147 = vshrl.u32 %v146, 7
    %v148 = vsub.s32 %v145, %v147
    %v149 = vrot.slane %v142, %v148
    %v151 = vadd.f32 %v134, %v149
    %v152 = vcombine.low %v62, %v63
    %v154 = vunpack.c.l.s4 1966171168
    %v155 = vunpack.c.0.s8 %v154
    %v156 = vlaneseq
    %v157 = vshrl.u32 %v156, 7
    %v158 = vsub.s32 %v155, %v157
    %v159 = vrot.slane %v152, %v158
    %v161 = vunpack.c.l.s4 1966171168
    %v162 = vunpack.c.0.s8 %v161
    %v163 = vlaneseq
    %v164 = vshrl.u32 %v163, 7
    %v165 = vsub.s32 %v162, %v164
    %v166 = vrot.slane %v159, %v165
    %v168 = vadd.f32 %v151, %v166
    %v169 = vcombine.low %v88, %v89
    %v171 = vunpack.c.l.s4 1966171168
    %v172 = vunpack.c.0.s8 %v171
    %v173 = vlaneseq
    %v174 = vshrl.u32 %v173, 7
    %v175 = vsub.s32 %v172, %v174
    %v176 = vrot.slane %v169, %v175
    %v178 = vunpack.c.l.s4 1966171168
    %v179 = vunpack.c.0.s8 %v178
    %v180 = vlaneseq
    %v181 = vshrl.u32 %v180, 7
    %v182 = vsub.s32 %v179, %v181
    %v183 = vrot.slane %v176, %v182
    %v185 = vadd.f32 %v168, %v183
    %v186 = vcombine.low %v114, %v115
    %v188 = vunpack.c.l.s4 1966171168
    %v189 = vunpack.c.0.s8 %v188
    %v190 = vlaneseq
    %v191 = vshrl.u32 %v190, 7
    %v192 = vsub.s32 %v189, %v191
    %v193 = vrot.slane %v186, %v192
    %v195 = vunpack.c.l.s4 1966171168
    %v196 = vunpack.c.0.s8 %v195
    %v197 = vlaneseq
    %v198 = vshrl.u32 %v197, 7
    %v199 = vsub.s32 %v196, %v198
    %v200 = vrot.slane %v193, %v199
    %v202 = vadd.f32 %v185, %v200
    %v203 = vmul.f32 %v42, %v42
    %v204 = vadd.f32 %v203, 0.0
    %v206 = vlaneseq
    %v207 = vshrl.u32 %v206, 7
    %v208 = vsub.s32 0, %v207
    %v209 = vrot.slane %v204, %v208
    %v210 = vlaneseq
    %v211 = vshrl.u32 %v210, 7
    %v212 = vsub.s32 1, %v211
    %v213 = vrot.slane %v204, %v212
    %216 = vrot.lane.b32.xlu0 %v209, 32
    %v217 = vpop.permute.xlu0 %216
    %218 = vrot.lane.b32.xlu0 %v213, 32
    %v219 = vpop.permute.xlu0 %218
    %v220 = vsel %vm61, %v217, %v219
    %v221 = vsel %vm61, %v219, %v217
    %v224 = vcombine.low %v221, %v220
    %v226 = vunpack.c.l.s4 1966171168
    %v227 = vunpack.c.0.s8 %v226
    %v228 = vlaneseq
    %v229 = vshrl.u32 %v228, 7
    %v230 = vsub.s32 %v227, %v229
    %v231 = vrot.slane %v224, %v230
    %v233 = vunpack.c.l.s4 1966171168
    %v234 = vunpack.c.0.s8 %v233
    %v235 = vlaneseq
    %v236 = vshrl.u32 %v235, 7
    %v237 = vsub.s32 %v234, %v236
    %v238 = vrot.slane %v231, %v237
    %v240 = vadd.f32 %v204, %v238
    %241 = vrot.lane.b32.xlu0 %v209, 64
    %v242 = vpop.permute.xlu0 %241
    %243 = vrot.lane.b32.xlu0 %v213, 64
    %v244 = vpop.permute.xlu0 %243
    %v245 = vsel %vm87, %v242, %v244
    %v246 = vsel %vm87, %v244, %v242
    %v249 = vcombine.low %v246, %v245
    %v251 = vunpack.c.l.s4 1966171168
    %v252 = vunpack.c.0.s8 %v251
    %v253 = vlaneseq
    %v254 = vshrl.u32 %v253, 7
    %v255 = vsub.s32 %v252, %v254
    %v256 = vrot.slane %v249, %v255
    %v258 = vunpack.c.l.s4 1966171168
    %v259 = vunpack.c.0.s8 %v258
    %v260 = vlaneseq
    %v261 = vshrl.u32 %v260, 7
    %v262 = vsub.s32 %v259, %v261
    %v263 = vrot.slane %v256, %v262
    %v265 = vadd.f32 %v240, %v263
    %266 = vrot.lane.b32.xlu0 %v209, 96
    %v267 = vpop.permute.xlu0 %266
    %268 = vrot.lane.b32.xlu0 %v213, 96
    %v269 = vpop.permute.xlu0 %268
    %v270 = vsel %vm113, %v267, %v269
    %v271 = vsel %vm113, %v269, %v267
    %v274 = vcombine.low %v271, %v270
    %v276 = vunpack.c.l.s4 1966171168
    %v277 = vunpack.c.0.s8 %v276
    %v278 = vlaneseq
    %v279 = vshrl.u32 %v278, 7
    %v280 = vsub.s32 %v277, %v279
    %v281 = vrot.slane %v274, %v280
    %v283 = vunpack.c.l.s4 1966171168
    %v284 = vunpack.c.0.s8 %v283
    %v285 = vlaneseq
    %v286 = vshrl.u32 %v285, 7
    %v287 = vsub.s32 %v284, %v286
    %v288 = vrot.slane %v281, %v287
    %v290 = vadd.f32 %v265, %v288
    %v291 = vcombine.low %v213, %v209
    %v293 = vunpack.c.l.s4 1966171168
    %v294 = vunpack.c.0.s8 %v293
    %v295 = vlaneseq
    %v296 = vshrl.u32 %v295, 7
    %v297 = vsub.s32 %v294, %v296
    %v298 = vrot.slane %v291, %v297
    %v300 = vunpack.c.l.s4 1966171168
    %v301 = vunpack.c.0.s8 %v300
    %v302 = vlaneseq
    %v303 = vshrl.u32 %v302, 7
    %v304 = vsub.s32 %v301, %v303
    %v305 = vrot.slane %v298, %v304
    %v307 = vadd.f32 %v290, %v305
    %v308 = vcombine.low %v220, %v221
    %v310 = vunpack.c.l.s4 1966171168
    %v311 = vunpack.c.0.s8 %v310
    %v312 = vlaneseq
    %v313 = vshrl.u32 %v312, 7
    %v314 = vsub.s32 %v311, %v313
    %v315 = vrot.slane %v308, %v314
    %v317 = vunpack.c.l.s4 1966171168
    %v318 = vunpack.c.0.s8 %v317
    %v319 = vlaneseq
    %v320 = vshrl.u32 %v319, 7
    %v321 = vsub.s32 %v318, %v320
    %v322 = vrot.slane %v315, %v321
    %v324 = vadd.f32 %v307, %v322
    %v325 = vcombine.low %v245, %v246
    %v327 = vunpack.c.l.s4 1966171168
    %v328 = vunpack.c.0.s8 %v327
    %v329 = vlaneseq
    %v330 = vshrl.u32 %v329, 7
    %v331 = vsub.s32 %v328, %v330
    %v332 = vrot.slane %v325, %v331
    %v334 = vunpack.c.l.s4 1966171168
    %v335 = vunpack.c.0.s8 %v334
    %v336 = vlaneseq
    %v337 = vshrl.u32 %v336, 7
    %v338 = vsub.s32 %v335, %v337
    %v339 = vrot.slane %v332, %v338
    %v341 = vadd.f32 %v324, %v339
    %v342 = vcombine.low %v270, %v271
    %v344 = vunpack.c.l.s4 1966171168
    %v345 = vunpack.c.0.s8 %v344
    %v346 = vlaneseq
    %v347 = vshrl.u32 %v346, 7
    %v348 = vsub.s32 %v345, %v347
    %v349 = vrot.slane %v342, %v348
    %v351 = vunpack.c.l.s4 1966171168
    %v352 = vunpack.c.0.s8 %v351
    %v353 = vlaneseq
    %v354 = vshrl.u32 %v353, 7
    %v355 = vsub.s32 %v352, %v354
    %v356 = vrot.slane %v349, %v355
    %v358 = vadd.f32 %v341, %v356
    %v359 = vmul.f32 %v202, 0.125
    %v360 = vmul.f32 %v358, 0.125
    %v361 = vmul.f32 %v359, %v359
    %v362 = vsub.f32 %v360, %v361
    %v363 = vmax.f32 %v362, 0.0
    %v364 = vadd.f32 %v363, 1e-08
    %v365 = vrsqrt.pop %v364
    %v366 = vld [vmem:[%s2] sm:$0x3]
    %v367 = vmul.f32 %v366, %v365
    %v368 = vld [vmem:[%s3] sm:$0x3]
    %v369 = vmul.f32 %v359, %v367
    %v370 = vsub.f32 %v368, %v369
    %v371 = vld [vmem:[#allocation5] sm:$0x3]
    %v372 = vmul.f32 %v42, %v367
    %v373 = vadd.f32 %v372, %v370
    %v374 = vxor.u32 %v373, 2147483648
    %v375 = vmul.f32 %v374, 1.442695
    %v376 = vpow.pop %v375
    %v377 = vadd.f32 %v376, 1.0
    %v378 = vrcp.pop %v377
    %v379 = vmul.f32 1.0, %v378
    %v380 = vsub.f32 1.0, %v371
    %v381 = vmul.f32 %v379, %v380
    %v382 = vadd.f32 %v371, %v381
    %v383 = vmul.f32 %v42, %v382
    %v384 = vlaneseq
    %vm385 = vcmp.ge.s32.totalorder %v384, 0
    %vm386 = vcmp.lt.s32.totalorder %v384, 256
    %vm387 = vmand %vm385, %vm386
    %388 = vst.msk [vmem:[#allocation7] sm:$0x3] %vm387, %v383
    // Predicated region
    $region26: #{tpu_custom_call.1} parent=1 // pred_check
      _
    $region27: #{tpu_custom_call.1} parent=1 // pred_check_branch
      %390 = sbr.rel (0) target = $region29
    $region28: #{tpu_custom_call.1} parent=1 // pred_region
      %s392 = ssub.s32 32, 32
      %393 = vsyncadd [#allocation4], %s392
      %s395 = sshll.u32 [#allocation7], 4
      %s396 = int_to_ptr.vmem [resolvable:$true] %s395
      %398 = dma.vmem_to_hbm [thread:$0]  %s396, 32, %s4, [#allocation4]
    $region29: #{tpu_custom_call.1} parent=1 // pred_fallthru
      _
    // Predicated region
    $region30: #{tpu_custom_call.1} parent=1 // pred_check
      _
    $region31: #{tpu_custom_call.1} parent=1 // pred_check_branch
      %400 = sbr.rel (0) target = $region33
    $region32: #{tpu_custom_call.1} parent=1 // pred_region
      %401 = dma.done [#allocation4], 32
    $region33: #{tpu_custom_call.1} parent=1 // pred_fallthru
      _
    %402 = vsyncpa [#allocation3], 1
    %403 = vsyncpa [#allocation6], 1
    %404 = vsyncpa [#allocation4], 1

</llo_original>
